<compile_context>
chip_gen: v7x
topology: tpu7x:2x2x1
jax: 0.10.0
libtpu: 0.0.40
codegen_flags: <defaults>
</compile_context>

<pallas_src>
import jax
import jax.numpy as jnp
from jax.experimental import pallas as pl
from jax.experimental.pallas import tpu as pltpu


def _cdiv(a, b):
    return -(-a // b)


def _round_up(a, b):
    return _cdiv(a, b) * b


def _center_loss_kernel(xs_ref, ys_ref, center_ref, c_sq_ref, dist_ref, cnt_ref):
    """One batch tile: accumulate per-class distance sums and counts."""
    step = pl.program_id(1)

    @pl.when(step == 0)
    def _init():
        dist_ref[...] = jnp.zeros_like(dist_ref)
        cnt_ref[...] = jnp.zeros_like(cnt_ref)

    xs = xs_ref[...]            # (TN, F) f32
    ys = ys_ref[...]            # (TN, 1) i32 (padded rows carry label C)
    center = center_ref[...]    # (C, F) f32, resident across the grid
    c_sq = c_sq_ref[...]        # (1, C) f32, precomputed ||center_c||^2

    tn = xs.shape[0]
    num_cls = center.shape[0]

    cls_ids = jax.lax.broadcasted_iota(jnp.int32, (tn, num_cls), 1)
    onehot = (ys == cls_ids).astype(jnp.float32)       # (TN, C); all-zero for pad rows

    # ||x - c_y||^2 = ||x||^2 + (||c||^2 - 2 x.c)[y]  -- dense MXU matmul, K = F.
    g = jax.lax.dot_general(xs, center, (((1,), (1,)), ((), ())),
                            preferred_element_type=jnp.float32)      # (TN, C)
    x_sq = jnp.sum(xs * xs, axis=1, keepdims=True)                   # (TN, 1)  VPU/XLU
    sel = jnp.sum(onehot * (c_sq - 2.0 * g), axis=1, keepdims=True)  # (TN, 1)  VPU/XLU

    sq_dist = jnp.maximum(x_sq + sel, 0.0)   # clamp cancellation before sqrt
    dist = jnp.sqrt(sq_dist)                 # (TN, 1)  EUP

    # Per-class accumulation into the resident output blocks (sublane reduce).
    dist_ref[...] += jnp.sum(onehot * dist, axis=0, keepdims=True)[None]  # (1,1,C)
    cnt_ref[...] += jnp.sum(onehot, axis=0, keepdims=True)[None]          # (1,1,C)


def center_loss(xs, ys, center, *, block_rows=512, num_core_splits=2):
    """CenterLoss forward. xs:(N,F) f32, ys:(N,) int labels in [0,C), center:(C,F)."""
    xs = xs.astype(jnp.float32)
    center = center.astype(jnp.float32)
    ys = ys.astype(jnp.int32)

    n, f = xs.shape
    c = center.shape[0]

    splits = max(1, min(num_core_splits, n))          # parallel axis (v7x: 2 TCs)
    rows_per_split = _cdiv(n, splits)
    tn = min(block_rows, _round_up(rows_per_split, 8))
    steps = _cdiv(rows_per_split, tn)
    n_pad = splits * steps * tn

    pad = n_pad - n
    xs_p = jnp.pad(xs, ((0, pad), (0, 0)))
    # Padded rows get the out-of-range label C -> one-hot row is all zeros.
    ys_p = jnp.pad(ys.reshape(n, 1), ((0, pad), (0, 0)), constant_values=c)
    c_sq = jnp.sum(center * center, axis=1)[None, :]  # (1, C) precomputed row norms

    # Rough VMEM budget: double-buffered xs/ys tiles + resident center + working set.
    tile_bytes = tn * f * 4 + tn * 128 * 4            # xs + lane-padded ys, per buffer
    est = 2 * 2 * tile_bytes + 2 * c * f * 4 + 4 * tn * max(c, 128) * 4 + (2 << 20)
    vmem_limit = int(min(max(2 * est, 16 << 20), 64 << 20))

    dist_sums, counts = pl.pallas_call(
        _center_loss_kernel,
        out_shape=(
            jax.ShapeDtypeStruct((splits, 1, c), jnp.float32),
            jax.ShapeDtypeStruct((splits, 1, c), jnp.float32),
        ),
        grid_spec=pltpu.PrefetchScalarGridSpec(
            num_scalar_prefetch=0,
            grid=(splits, steps),
            in_specs=[
                pl.BlockSpec((tn, f), lambda s, i: (s * steps + i, 0)),
                pl.BlockSpec((tn, 1), lambda s, i: (s * steps + i, 0)),
                pl.BlockSpec((c, f), lambda s, i: (0, 0)),      # resident center
                pl.BlockSpec((1, c), lambda s, i: (0, 0)),      # resident row norms
            ],
            out_specs=[
                pl.BlockSpec((1, 1, c), lambda s, i: (s, 0, 0)),
                pl.BlockSpec((1, 1, c), lambda s, i: (s, 0, 0)),
            ],
        ),
        compiler_params=pltpu.CompilerParams(
            dimension_semantics=("parallel", "arbitrary"),
            vmem_limit_bytes=vmem_limit,
        ),
    )(xs_p, ys_p, center, c_sq)

    dist_per_class = jnp.sum(dist_sums[:, 0, :], axis=0)     # (C,)
    count_per_class = jnp.sum(counts[:, 0, :], axis=0)       # (C,)
    # sum_i dist_i / count_{y_i}  ==  sum_c (sum_{i: y_i=c} dist_i) / count_c
    # (classes with count 0 have dist sum exactly 0, so max(count,1) is exact)
    return jnp.sum(dist_per_class / jnp.maximum(count_per_class, 1.0))


def center_loss_ref(xs, ys, center):
    # pure-JAX reference mirroring the PyTorch module
    ysi = ys.astype(jnp.int32)
    center_exp = center[ysi]                                   # (N, F)
    c = center.shape[0]
    count = jnp.sum(jax.nn.one_hot(ysi, c, dtype=jnp.float32), axis=0)  # (C,)
    count_exp = count[ysi]                                     # (N,)
    dist = jnp.sqrt(jnp.sum((xs - center_exp) ** 2, axis=1))
    return jnp.sum(dist / count_exp)


if __name__ == "__main__":
    # small deterministic setup: batch=8, cls_num=10, feature_num=32
    N, CLS_NUM, FEATURE_NUM = 8, 10, 32

    key = jax.random.PRNGKey(0)
    k_center, k_xs, k_ys = jax.random.split(key, 3)

    # nn.Parameter(torch.randn(cls_num, feature_num)) — deterministic init here
    center = jax.random.normal(k_center, (CLS_NUM, FEATURE_NUM), dtype=jnp.float32)
    xs = jax.random.normal(k_xs, (N, FEATURE_NUM), dtype=jnp.float32)
    ys = jax.random.randint(k_ys, (N,), 0, CLS_NUM, dtype=jnp.int32)

    loss = jax.block_until_ready(center_loss(xs, ys, center))
    ref = jax.block_until_ready(center_loss_ref(xs, ys, center))

    assert jnp.allclose(loss, ref, rtol=1e-4, atol=1e-4), (loss, ref)
    print("KERNEL_OK")
</pallas_src>

<mosaic_0001>
module attributes {stable_mosaic.version = 11 : i64} {
  func.func @_center_loss_kernel(%arg0: i32, %arg1: i32, %arg2: memref<8x32xf32, #tpu.memory_space<vmem>>, %arg3: memref<8x1xi32, #tpu.memory_space<vmem>>, %arg4: memref<10x32xf32, #tpu.memory_space<vmem>>, %arg5: memref<1x10xf32, #tpu.memory_space<vmem>>, %arg6: memref<1x1x10xf32, #tpu.memory_space<vmem>>, %arg7: memref<1x1x10xf32, #tpu.memory_space<vmem>>) attributes {dimension_semantics = [#tpu.dimension_semantics<parallel>, #tpu.dimension_semantics<arbitrary>], iteration_bounds = array<i64: 2, 1>, scalar_prefetch = 0 : i64, scratch_operands = 0 : i64, tpu.core_type = #tpu.core_type<tc>, window_params = [{transform_indices = @transform_0, window_bounds = array<i64: 8, 32>}, {transform_indices = @transform_1, window_bounds = array<i64: 8, 1>}, {pipeline_mode = #tpu.pipeline_mode<synchronous>, transform_indices = @transform_2, window_bounds = array<i64: 10, 32>}, {pipeline_mode = #tpu.pipeline_mode<synchronous>, transform_indices = @transform_3, window_bounds = array<i64: 1, 10>}, {transform_indices = @transform_4, window_bounds = array<i64: 1, 1, 10>}, {transform_indices = @transform_5, window_bounds = array<i64: 1, 1, 10>}]} {
    %c0_i32 = arith.constant 0 : i32
    %0 = arith.cmpi eq, %arg1, %c0_i32 : i32
    %1 = arith.extui %0 : i1 to i32
    %c0_i32_0 = arith.constant 0 : i32
    %2 = arith.cmpi ne, %1, %c0_i32_0 : i32
    scf.if %2 {
      %cst_26 = arith.constant 0.000000e+00 : f32
      %41 = vector.broadcast %cst_26 : f32 to vector<1x1x10xf32>
      %c0_27 = arith.constant 0 : index
      %c0_28 = arith.constant 0 : index
      %c0_29 = arith.constant 0 : index
      %42 = vector.load %arg6[%c0_27, %c0_28, %c0_29] : memref<1x1x10xf32, #tpu.memory_space<vmem>>, vector<1x1x10xf32>
      tpu.vector_store %arg6[%c0_27, %c0_28, %c0_29], %41 {strides = array<i32>} : memref<1x1x10xf32, #tpu.memory_space<vmem>>, vector<1x1x10xf32>,
      %cst_30 = arith.constant 0.000000e+00 : f32
      %43 = vector.broadcast %cst_30 : f32 to vector<1x1x10xf32>
      %c0_31 = arith.constant 0 : index
      %c0_32 = arith.constant 0 : index
      %c0_33 = arith.constant 0 : index
      %44 = vector.load %arg7[%c0_31, %c0_32, %c0_33] : memref<1x1x10xf32, #tpu.memory_space<vmem>>, vector<1x1x10xf32>
      tpu.vector_store %arg7[%c0_31, %c0_32, %c0_33], %43 {strides = array<i32>} : memref<1x1x10xf32, #tpu.memory_space<vmem>>, vector<1x1x10xf32>,
    } else {
    }
    %c0 = arith.constant 0 : index
    %c0_1 = arith.constant 0 : index
    %3 = vector.load %arg2[%c0, %c0_1] : memref<8x32xf32, #tpu.memory_space<vmem>>, vector<8x32xf32>
    %c0_2 = arith.constant 0 : index
    %c0_3 = arith.constant 0 : index
    %4 = vector.load %arg3[%c0_2, %c0_3] : memref<8x1xi32, #tpu.memory_space<vmem>>, vector<8x1xi32>
    %c0_4 = arith.constant 0 : index
    %c0_5 = arith.constant 0 : index
    %5 = vector.load %arg4[%c0_4, %c0_5] : memref<10x32xf32, #tpu.memory_space<vmem>>, vector<10x32xf32>
    %c0_6 = arith.constant 0 : index
    %c0_7 = arith.constant 0 : index
    %6 = vector.load %arg5[%c0_6, %c0_7] : memref<1x10xf32, #tpu.memory_space<vmem>>, vector<1x10xf32>
    %7 = tpu.iota {dimensions = array<i32: 1>} : vector<8x10xi32>
    %8 = vector.broadcast %4 : vector<8x1xi32> to vector<8x10xi32>
    %9 = arith.cmpi eq, %8, %7 : vector<8x10xi32>
    %10 = arith.extui %9 : vector<8x10xi1> to vector<8x10xi32>
    %11 = arith.sitofp %10 : vector<8x10xi32> to vector<8x10xf32>
    %cst = arith.constant dense<0.000000e+00> : vector<8x10xf32>
    %12 = tpu.matmul %3, %5, %cst {dimension_numbers = #tpu.dot_dimension_numbers<[1], [1], [0], [0], [0, 0, 1, 0], [], []>} : vector<8x32xf32>, vector<10x32xf32>, vector<8x10xf32> -> vector<8x10xf32>
    %13 = arith.mulf %3, %3 : vector<8x32xf32>
    %cst_8 = arith.constant dense<0.000000e+00> : vector<8xf32>
    %14 = vector.multi_reduction <add>, %13, %cst_8 [1] : vector<8x32xf32> to vector<8xf32>
    %15 = vector.shape_cast %14 : vector<8xf32> to vector<8x1xf32>
    %cst_9 = arith.constant 2.000000e+00 : f32
    %16 = vector.broadcast %cst_9 : f32 to vector<8x10xf32>
    %17 = arith.mulf %16, %12 : vector<8x10xf32>
    %18 = vector.broadcast %6 : vector<1x10xf32> to vector<8x10xf32>
    %19 = arith.subf %18, %17 : vector<8x10xf32>
    %20 = arith.mulf %11, %19 : vector<8x10xf32>
    %cst_10 = arith.constant dense<0.000000e+00> : vector<8xf32>
    %21 = vector.multi_reduction <add>, %20, %cst_10 [1] : vector<8x10xf32> to vector<8xf32>
    %22 = vector.shape_cast %21 : vector<8xf32> to vector<8x1xf32>
    %23 = arith.addf %15, %22 : vector<8x1xf32>
    %cst_11 = arith.constant 0.000000e+00 : f32
    %24 = vector.broadcast %cst_11 : f32 to vector<8x1xf32>
    %25 = arith.maximumf %23, %24 : vector<8x1xf32>
    %26 = math.sqrt %25 : vector<8x1xf32>
    %c0_12 = arith.constant 0 : index
    %c0_13 = arith.constant 0 : index
    %c0_14 = arith.constant 0 : index
    %27 = vector.load %arg6[%c0_12, %c0_13, %c0_14] : memref<1x1x10xf32, #tpu.memory_space<vmem>>, vector<1x1x10xf32>
    %28 = vector.broadcast %26 : vector<8x1xf32> to vector<8x10xf32>
    %29 = arith.mulf %11, %28 : vector<8x10xf32>
    %cst_15 = arith.constant dense<0.000000e+00> : vector<10xf32>
    %30 = vector.multi_reduction <add>, %29, %cst_15 [0] : vector<8x10xf32> to vector<10xf32>
    %31 = vector.shape_cast %30 : vector<10xf32> to vector<1x10xf32>
    %32 = vector.shape_cast %31 : vector<1x10xf32> to vector<1x1x10xf32>
    %33 = arith.addf %27, %32 : vector<1x1x10xf32>
    %c0_16 = arith.constant 0 : index
    %c0_17 = arith.constant 0 : index
    %c0_18 = arith.constant 0 : index
    %34 = vector.load %arg6[%c0_16, %c0_17, %c0_18] : memref<1x1x10xf32, #tpu.memory_space<vmem>>, vector<1x1x10xf32>
    tpu.vector_store %arg6[%c0_16, %c0_17, %c0_18], %33 {strides = array<i32>} : memref<1x1x10xf32, #tpu.memory_space<vmem>>, vector<1x1x10xf32>,
    %c0_19 = arith.constant 0 : index
    %c0_20 = arith.constant 0 : index
    %c0_21 = arith.constant 0 : index
    %35 = vector.load %arg7[%c0_19, %c0_20, %c0_21] : memref<1x1x10xf32, #tpu.memory_space<vmem>>, vector<1x1x10xf32>
    %cst_22 = arith.constant dense<0.000000e+00> : vector<10xf32>
    %36 = vector.multi_reduction <add>, %11, %cst_22 [0] : vector<8x10xf32> to vector<10xf32>
    %37 = vector.shape_cast %36 : vector<10xf32> to vector<1x10xf32>
    %38 = vector.shape_cast %37 : vector<1x10xf32> to vector<1x1x10xf32>
    %39 = arith.addf %35, %38 : vector<1x1x10xf32>
    %c0_23 = arith.constant 0 : index
    %c0_24 = arith.constant 0 : index
    %c0_25 = arith.constant 0 : index
    %40 = vector.load %arg7[%c0_23, %c0_24, %c0_25] : memref<1x1x10xf32, #tpu.memory_space<vmem>>, vector<1x1x10xf32>
    tpu.vector_store %arg7[%c0_23, %c0_24, %c0_25], %39 {strides = array<i32>} : memref<1x1x10xf32, #tpu.memory_space<vmem>>, vector<1x1x10xf32>,
    return
  }
  func.func @transform_0(%arg0: i32, %arg1: i32) -> (i32, i32) {
    %c1_i32 = arith.constant 1 : i32
    %0 = arith.muli %arg0, %c1_i32 : i32
    %1 = arith.addi %0, %arg1 : i32
    %c0_i32 = arith.constant 0 : i32
    %c0_i32_0 = arith.constant 0 : i32
    return %1, %c0_i32 : i32, i32
  }
  func.func @transform_1(%arg0: i32, %arg1: i32) -> (i32, i32) {
    %c1_i32 = arith.constant 1 : i32
    %0 = arith.muli %arg0, %c1_i32 : i32
    %1 = arith.addi %0, %arg1 : i32
    %c0_i32 = arith.constant 0 : i32
    %c0_i32_0 = arith.constant 0 : i32
    return %1, %c0_i32 : i32, i32
  }
  func.func @transform_2(%arg0: i32, %arg1: i32) -> (i32, i32) {
    %c0_i32 = arith.constant 0 : i32
    %c0_i32_0 = arith.constant 0 : i32
    %c0_i32_1 = arith.constant 0 : i32
    return %c0_i32, %c0_i32_0 : i32, i32
  }
  func.func @transform_3(%arg0: i32, %arg1: i32) -> (i32, i32) {
    %c0_i32 = arith.constant 0 : i32
    %c0_i32_0 = arith.constant 0 : i32
    %c0_i32_1 = arith.constant 0 : i32
    return %c0_i32, %c0_i32_0 : i32, i32
  }
  func.func @transform_4(%arg0: i32, %arg1: i32) -> (i32, i32, i32) {
    %c0_i32 = arith.constant 0 : i32
    %c0_i32_0 = arith.constant 0 : i32
    %c0_i32_1 = arith.constant 0 : i32
    return %arg0, %c0_i32, %c0_i32_0 : i32, i32, i32
  }
  func.func @transform_5(%arg0: i32, %arg1: i32) -> (i32, i32, i32) {
    %c0_i32 = arith.constant 0 : i32
    %c0_i32_0 = arith.constant 0 : i32
    %c0_i32_1 = arith.constant 0 : i32
    return %arg0, %c0_i32, %c0_i32_0 : i32, i32, i32
  }
}

</mosaic_0001>

<llo_original>
// kernel: tpu_custom_call.1
$region0: #{tpu_custom_call.1}
  #allocation0 [shape = 'u32[]', space=smem, size = 0x4, offset = 0x4, fixed_abs, tag = 'smem constant byte address 0x4 - core index']
  #allocation1 [shape = 'u32[144,128]{1,0:T(1,128)}', space=vmem, size = 0x12000, scoped, tag = 'internal scratch']
  %s0 = inlined_call_operand.vmem [shape: f32[16,32], index: 0, kind: input, shape index: {}]
  %s1 = inlined_call_operand.vmem [shape: s32[16,1], index: 1, kind: input, shape index: {}]
  %s2 = inlined_call_operand.hbm [shape: f32[10,32], index: 2, kind: input, shape index: {}]
  %s3 = inlined_call_operand.vmem [shape: f32[1,10], index: 3, kind: input, shape index: {}]
  %s4 = inlined_call_operand.hbm [shape: f32[2,1,10], index: 4, kind: output, shape index: {0}]
  %s5 = inlined_call_operand.hbm [shape: f32[2,1,10], index: 5, kind: output, shape index: {1}]
  %6 = xla_tuple %s4, %s5
  %s7 = sld [smem:[#allocation0]]
  $region65: #{tpu_custom_call.1} parent=0
    _
  %s9 = ssub.s32 1, %s7
  %s10 = scalar_select 0, %s9, %s7
  $region1: #{tpu_custom_call.1} parent=0
    #allocation2 [shape = 'u8[8192]{0}', space=vmem, size = 0x2000, scoped, tag = 'input window, operand 2, single buffered']
    #allocation3 [shape = 's32[2]{0}', space=sflag, size = 0x8, scoped, tag = 'scoped memory for tpu_custom_call.1']
    #allocation4 [shape = 's32[2]{0}', space=sflag, size = 0x8, scoped, tag = 'scoped memory for tpu_custom_call.1']
    #allocation5 [shape = 'u8[1024]{0}', space=vmem, size = 0x400, scoped, tag = 'output window, operand 0']
    #allocation6 [shape = 'u8[1024]{0}', space=vmem, size = 0x400, scoped, tag = 'output window, operand 1']
    #allocation7 [shape = 's32[2]{0}', space=sflag, size = 0x8, scoped, tag = 'scoped memory for tpu_custom_call.1']
    %11 = vsyncpa [#allocation3], 0
    %12 = vsyncpa [#allocation4], 0
    %s13 = scalar_lea.sflag [#allocation4], 1
    %14 = vsyncpa %s13, 0
    %15 = vsyncpa [#allocation7], 0
    %s16 = scalar_lea.sflag [#allocation7], 1
    %17 = vsyncpa %s16, 0
    loop: start=0, step=1, limit=4
    $region2: #{tpu_custom_call.1} parent=1 // loop_pre_header
      _
    $region3: #{tpu_custom_call.1} parent=1 // loop_header
      %s19 = sphi 0, %s23
      %p20 = scmp.ge.s32.totalorder %s19, 4
      %s26 = sphi 0, %s38
      %s27 = sphi 0, %s34
      %s28 = sphi 0, %s26
      %s29 = sphi 0, %s27
      %s30 = sphi 0, %s28
      %s31 = sphi 0, %s29
      %s43 = sphi 0, %s45
      %s46 = sphi 0, %s43
      %s47 = sphi 0, %s46
      %s63 = sphi 0, %s47
      %s71 = sphi 0, %s73
      %s74 = sphi 0, %s71
      %s75 = sphi 0, %s74
      %s91 = sphi 0, %s75
      %s95 = sphi 0, %s95
      %s97 = sphi 0, %s95
      %s98 = sphi 0, %s97
      %s112 = sphi 0, %s98
      %s116 = sphi 0, %s116
      %s118 = sphi 0, %s116
      %s119 = sphi 0, %s118
      %s133 = sphi 0, %s119
      %s139 = sphi 0, %s141
      %s142 = sphi 0, %s139
      %s143 = sphi 0, %s142
      %s159 = sphi 0, %s143
      %s165 = sphi 0, %s167
      %s168 = sphi 0, %s165
      %s169 = sphi 0, %s168
      %s185 = sphi 0, %s169
    $region4: #{tpu_custom_call.1} parent=1 // loop_header_branch
      %22 = sbr.rel (%p20) target = $region8
    $region5: #{tpu_custom_call.1} parent=1 // loop_body
      %s24 = ssub.s32 %s19, 1
      %s25 = ssub.s32 %s19, 2
      %s32 = sadd.s32 1, %s27
      %p33 = scmp.ge.s32.totalorder %s32, 1
      %s34 = scalar_select %p33, 0, %s32
      %s35 = sadd.s32 1, %s26
      %s36 = scalar_select %p33, %s35, %s26
      %p37 = scmp.ge.s32.totalorder %s36, 2
      %s38 = scalar_select %p37, 0, %s36
      %s39 = sadd.s32 %s26, %s27
      %s40 = sadd.s32 %s38, %s34
      %s41 = ssub.s32 %s39, %s40
      %p42 = scmp.eq.s32.totalorder %s41, 0
      %s44 = sadd.s32 %s43, 1
      %s45 = scalar_select %p42, %s43, %s44
      %p48 = pneg %p42
      %p49 = scmp.eq.s32.totalorder %s19, 1
      %p50 = por %p48, %p49
      %p51 = scmp.ne.s32.totalorder %s43, %s46
      %p52 = scmp.eq.s32.totalorder %s19, 0
      %p53 = por %p51, %p52
      %p54 = scmp.ne.s32.totalorder %s43, %s46
      %p55 = scmp.eq.s32.totalorder %s24, 1
      %p56 = por %p54, %p55
      %p57 = scmp.ne.s32.totalorder %s46, %s47
      %p58 = scmp.eq.s32.totalorder %s24, 0
      %p59 = por %p57, %p58
      %p60 = scmp.ne.s32.totalorder %s46, %s47
      %p61 = scmp.eq.s32.totalorder %s25, 1
      %p62 = por %p60, %p61
      %p64 = scmp.ne.s32.totalorder %s47, %s63
      %p65 = scmp.eq.s32.totalorder %s25, 0
      %p66 = por %p64, %p65
      %s67 = sadd.s32 %s26, %s27
      %s68 = sadd.s32 %s38, %s34
      %s69 = ssub.s32 %s67, %s68
      %p70 = scmp.eq.s32.totalorder %s69, 0
      %s72 = sadd.s32 %s71, 1
      %s73 = scalar_select %p70, %s71, %s72
      %p76 = pneg %p70
      %p77 = scmp.eq.s32.totalorder %s19, 1
      %p78 = por %p76, %p77
      %p79 = scmp.ne.s32.totalorder %s71, %s74
      %p80 = scmp.eq.s32.totalorder %s19, 0
      %p81 = por %p79, %p80
      %p82 = scmp.ne.s32.totalorder %s71, %s74
      %p83 = scmp.eq.s32.totalorder %s24, 1
      %p84 = por %p82, %p83
      %p85 = scmp.ne.s32.totalorder %s74, %s75
      %p86 = scmp.eq.s32.totalorder %s24, 0
      %p87 = por %p85, %p86
      %p88 = scmp.ne.s32.totalorder %s74, %s75
      %p89 = scmp.eq.s32.totalorder %s25, 1
      %p90 = por %p88, %p89
      %p92 = scmp.ne.s32.totalorder %s75, %s91
      %p93 = scmp.eq.s32.totalorder %s25, 0
      %p94 = por %p92, %p93
      %s96 = sadd.s32 %s95, 1
      %p99 = scmp.eq.s32.totalorder %s19, 1
      %p100 = scmp.ne.s32.totalorder %s95, %s97
      %p101 = scmp.eq.s32.totalorder %s19, 0
      %p102 = por %p100, %p101
      %p103 = scmp.ne.s32.totalorder %s95, %s97
      %p104 = scmp.eq.s32.totalorder %s24, 1
      %p105 = por %p103, %p104
      %p106 = scmp.ne.s32.totalorder %s97, %s98
      %p107 = scmp.eq.s32.totalorder %s24, 0
      %p108 = por %p106, %p107
      %p109 = scmp.ne.s32.totalorder %s97, %s98
      %p110 = scmp.eq.s32.totalorder %s25, 1
      %p111 = por %p109, %p110
      %p113 = scmp.ne.s32.totalorder %s98, %s112
      %p114 = scmp.eq.s32.totalorder %s25, 0
      %p115 = por %p113, %p114
      %s117 = sadd.s32 %s116, 1
      %p120 = scmp.eq.s32.totalorder %s19, 1
      %p121 = scmp.ne.s32.totalorder %s116, %s118
      %p122 = scmp.eq.s32.totalorder %s19, 0
      %p123 = por %p121, %p122
      %p124 = scmp.ne.s32.totalorder %s116, %s118
      %p125 = scmp.eq.s32.totalorder %s24, 1
      %p126 = por %p124, %p125
      %p127 = scmp.ne.s32.totalorder %s118, %s119
      %p128 = scmp.eq.s32.totalorder %s24, 0
      %p129 = por %p127, %p128
      %p130 = scmp.ne.s32.totalorder %s118, %s119
      %p131 = scmp.eq.s32.totalorder %s25, 1
      %p132 = por %p130, %p131
      %p134 = scmp.ne.s32.totalorder %s119, %s133
      %p135 = scmp.eq.s32.totalorder %s25, 0
      %p136 = por %p134, %p135
      %s137 = ssub.s32 %s26, %s38
      %p138 = scmp.eq.s32.totalorder %s137, 0
      %s140 = sadd.s32 %s139, 1
      %s141 = scalar_select %p138, %s139, %s140
      %p144 = pneg %p138
      %p145 = scmp.eq.s32.totalorder %s19, 1
      %p146 = por %p144, %p145
      %p147 = scmp.ne.s32.totalorder %s139, %s142
      %p148 = scmp.eq.s32.totalorder %s19, 0
      %p149 = por %p147, %p148
      %p150 = scmp.ne.s32.totalorder %s139, %s142
      %p151 = scmp.eq.s32.totalorder %s24, 1
      %p152 = por %p150, %p151
      %p153 = scmp.ne.s32.totalorder %s142, %s143
      %p154 = scmp.eq.s32.totalorder %s24, 0
      %p155 = por %p153, %p154
      %p156 = scmp.ne.s32.totalorder %s142, %s143
      %p157 = scmp.eq.s32.totalorder %s25, 1
      %p158 = por %p156, %p157
      %p160 = scmp.ne.s32.totalorder %s143, %s159
      %p161 = scmp.eq.s32.totalorder %s25, 0
      %p162 = por %p160, %p161
      %s163 = ssub.s32 %s26, %s38
      %p164 = scmp.eq.s32.totalorder %s163, 0
      %s166 = sadd.s32 %s165, 1
      %s167 = scalar_select %p164, %s165, %s166
      %p170 = pneg %p164
      %p171 = scmp.eq.s32.totalorder %s19, 1
      %p172 = por %p170, %p171
      %p173 = scmp.ne.s32.totalorder %s165, %s168
      %p174 = scmp.eq.s32.totalorder %s19, 0
      %p175 = por %p173, %p174
      %p176 = scmp.ne.s32.totalorder %s165, %s168
      %p177 = scmp.eq.s32.totalorder %s24, 1
      %p178 = por %p176, %p177
      %p179 = scmp.ne.s32.totalorder %s168, %s169
      %p180 = scmp.eq.s32.totalorder %s24, 0
      %p181 = por %p179, %p180
      %p182 = scmp.ne.s32.totalorder %s168, %s169
      %p183 = scmp.eq.s32.totalorder %s25, 1
      %p184 = por %p182, %p183
      %p186 = scmp.ne.s32.totalorder %s169, %s185
      %p187 = scmp.eq.s32.totalorder %s25, 0
      %p188 = por %p186, %p187
      %p189 = scmp.le.s32.totalorder 1, %s19
      %p190 = scmp.lt.s32.totalorder %s19, 3
      %p191 = pnand %p189, %p190
      %p192 = pneg %p191
      // Predicated region
      $region9: #{tpu_custom_call.1} parent=5 // pred_check
        _
      $region10: #{tpu_custom_call.1} parent=5 // pred_check_branch
        %194 = sbr.rel (%p191) target = $region12
      $region11: #{tpu_custom_call.1} parent=5 // pred_region
        %s195 = ssub.s32 %s19, 1
        // Predicated region
        $region13: #{tpu_custom_call.1} parent=11 // pred_check
          %p196 = pneg %p108
        $region14: #{tpu_custom_call.1} parent=11 // pred_check_branch
          %198 = sbr.rel (%p196) target = $region16
        $region15: #{tpu_custom_call.1} parent=11 // pred_region
          %s200 = ssub.s32 256, 256
          %201 = vsyncadd [#allocation3], %s200
          %s202 = sshll.u32 [#allocation2], 4
          %s203 = int_to_ptr.vmem [resolvable:$true] %s202
          %208 = dma.hbm_to_vmem [thread:$0]  %s2, 256, %s203, [#allocation3], 128, 128, 8
        $region16: #{tpu_custom_call.1} parent=11 // pred_fallthru
          _
        // Predicated region
        $region17: #{tpu_custom_call.1} parent=11 // pred_check
          %p209 = pneg %p129
        $region18: #{tpu_custom_call.1} parent=11 // pred_check_branch
          %211 = sbr.rel (%p209) target = $region20
        $region19: #{tpu_custom_call.1} parent=11 // pred_region
          _
        $region20: #{tpu_custom_call.1} parent=11 // pred_fallthru
          _
      $region12: #{tpu_custom_call.1} parent=5 // pred_fallthru
        _
      %p212 = scmp.lt.s32.totalorder %s19, 2
      // Predicated region
      $region21: #{tpu_custom_call.1} parent=5 // pred_check
        %p213 = pneg %p212
      $region22: #{tpu_custom_call.1} parent=5 // pred_check_branch
        %215 = sbr.rel (%p213) target = $region24
      $region23: #{tpu_custom_call.1} parent=5 // pred_region
        // Predicated region
        $region25: #{tpu_custom_call.1} parent=23 // pred_check
          %p216 = pneg %p53
        $region26: #{tpu_custom_call.1} parent=23 // pred_check_branch
          %218 = sbr.rel (%p216) target = $region28
        $region27: #{tpu_custom_call.1} parent=23 // pred_region
          %s219 = sadd.s32 %s26, %s27
          %p220 = scmp.lt.s32.totalorder %s219, 1
          %s221 = scalar_select %p220, %s219, 1
          %s222 = smul.addr %s221, 8
          %s223 = scalar_lea.vmem %s0, %s222
          %s224 = sadd.s32 %s26, %s27
        $region28: #{tpu_custom_call.1} parent=23 // pred_fallthru
          _
        // Predicated region
        $region29: #{tpu_custom_call.1} parent=23 // pred_check
          %p225 = pneg %p81
        $region30: #{tpu_custom_call.1} parent=23 // pred_check_branch
          %227 = sbr.rel (%p225) target = $region32
        $region31: #{tpu_custom_call.1} parent=23 // pred_region
          %s228 = sadd.s32 %s26, %s27
          %p229 = scmp.lt.s32.totalorder %s228, 1
          %s230 = scalar_select %p229, %s228, 1
          %s231 = smul.addr %s230, 8
          %s232 = scalar_lea.vmem %s1, %s231
          %s233 = sadd.s32 %s26, %s27
        $region32: #{tpu_custom_call.1} parent=23 // pred_fallthru
          _
      $region24: #{tpu_custom_call.1} parent=5 // pred_fallthru
        _
      %p234 = scmp.le.s32.totalorder 1, %s19
      %p235 = scmp.lt.s32.totalorder %s19, 3
      %p236 = pnand %p234, %p235
      %p237 = pneg %p236
      // Predicated region
      $region33: #{tpu_custom_call.1} parent=5 // pred_check
        _
      $region34: #{tpu_custom_call.1} parent=5 // pred_check_branch
        %239 = sbr.rel (%p236) target = $region36
      $region35: #{tpu_custom_call.1} parent=5 // pred_region
        %s240 = ssub.s32 %s19, 1
        // Predicated region
        $region37: #{tpu_custom_call.1} parent=35 // pred_check
          %p241 = pneg %p108
        $region38: #{tpu_custom_call.1} parent=35 // pred_check_branch
          %243 = sbr.rel (%p241) target = $region40
        $region39: #{tpu_custom_call.1} parent=35 // pred_region
          %244 = dma.done [#allocation3], 256
        $region40: #{tpu_custom_call.1} parent=35 // pred_fallthru
          _
        %s245 = sadd.s32 %s28, %s29
        %p246 = scmp.lt.s32.totalorder %s245, 1
        %s247 = scalar_select %p246, %s245, 1
        %s248 = smul.addr %s247, 8
        %s249 = scalar_lea.vmem %s0, %s248
        %p250 = pneg %p59
        %p251 = pneg %p56
        %s252 = sadd.s32 %s28, %s29
        %p253 = scmp.lt.s32.totalorder %s252, 1
        %s254 = scalar_select %p253, %s252, 1
        %s255 = smul.addr %s254, 8
        %s256 = scalar_lea.vmem %s1, %s255
        %p257 = pneg %p87
        %p258 = pneg %p84
        %p259 = pneg %p108
        %p260 = pneg %p105
        %p261 = pneg %p129
        %p262 = pneg %p126
        %p263 = pneg %p155
        %p264 = pneg %p152
        %s265 = sand.u32 %s142, 1
        %s266 = scalar_lea.sflag [#allocation4], %s265
        %s267 = sand.u32 %s142, 1
        %s268 = scalar_lea.vmem [#allocation5], %s267
        %p269 = pneg %p181
        %p270 = pneg %p178
        %s271 = sand.u32 %s168, 1
        %s272 = scalar_lea.sflag [#allocation7], %s271
        %s273 = sand.u32 %s168, 1
        %s274 = scalar_lea.vmem [#allocation6], %s273
        %s275 = sadd.s32 %s28, %s29
        %p276 = scmp.lt.s32.totalorder %s275, 1
        %s277 = scalar_select %p276, %s275, 1
        %s278 = smul.addr %s277, 8
        %s279 = scalar_lea.vmem %s0, %s278
        %s280 = sadd.s32 %s28, %s29
        %s281 = sadd.s32 %s28, %s29
        %p282 = scmp.lt.s32.totalorder %s281, 1
        %s283 = scalar_select %p282, %s281, 1
        %s284 = smul.addr %s283, 8
        %s285 = scalar_lea.vmem %s1, %s284
        %s286 = sadd.s32 %s28, %s29
        %p287 = scmp.eq.s32.totalorder %s29, 0
        // Predicated region
        $region41: #{tpu_custom_call.1} parent=35 // pred_check
          %p288 = pneg %p287
        $region42: #{tpu_custom_call.1} parent=35 // pred_check_branch
          %290 = sbr.rel (%p288) target = $region44
        $region43: #{tpu_custom_call.1} parent=35 // pred_region
          %vm291 = vcmask 73728
          %292 = vst.msk [vmem:[%s268] sm:$0x1] %vm291, 0.0
          %293 = vst.msk [vmem:[%s274] sm:$0x1] %vm291, 0.0
        $region44: #{tpu_custom_call.1} parent=35 // pred_fallthru
          _
        %v294 = vld [vmem:[%s279] sm:$0xff]
        %v295 = vld [vmem:[%s285] sm:$0xff]
        %v296 = vld [vmem:[#allocation2] sm:$0xff]
        %v297 = vld [vmem:[#allocation2 + $0x8] sm:$0x3]
        %v298 = vld [vmem:[%s3] sm:$0x1]
        %v299 = vlaneseq
        %v300 = vand.u32 %v299, 127
        %301 = vset.pattern.permute.xlu0 0
        %302 = vperm.xlu0 %301, %v295
        %v303 = vpop.permute.xlu0 %302
        %vm304 = vcmp.eq.s32.totalorder %v303, %v300
        %v305 = vsel %vm304, 1, 0
        %v306 = vcvt.s32.f32 %v305
        %vm307 = vcmask 261120
        %v309 = vsel %vm307, %v294, 0
        %v312 = vsel %vm307, %v296, 0
        %v315 = vsel %vm307, %v297, 0
        %317 = vmatprep.subr.mxu0 0.0
        %318 = vmatpush1.xpose.msra.mxu0 %v312
        %319 = vmatprep.subr.mxu0 0.0
        %320 = vmatpush1.xpose.msra.mxu0 %v315
        %321 = vmatprep.subr.mxu0 0.0
        %322 = vmatpush1.xpose.msra.mxu0 0.0
        %323 = vmatprep.subr.mxu0 0.0
        %324 = vmatpush1.xpose.msra.mxu0 0.0
        %325 = vmatprep.subr.mxu0 0.0
        %326 = vmatpush1.xpose.msra.mxu0 0.0
        %327 = vmatprep.subr.mxu0 0.0
        %328 = vmatpush1.xpose.msra.mxu0 0.0
        %329 = vmatprep.subr.mxu0 0.0
        %330 = vmatpush1.xpose.msra.mxu0 0.0
        %331 = vmatprep.subr.mxu0 0.0
        %332 = vmatpush1.xpose.msra.mxu0 0.0
        %333 = vmatprep.subr.mxu0 0.0
        %334 = vmatpush1.xpose.msra.mxu0 0.0
        %335 = vmatprep.subr.mxu0 0.0
        %336 = vmatpush1.xpose.msra.mxu0 0.0
        %337 = vmatprep.subr.mxu0 0.0
        %338 = vmatpush1.xpose.msra.mxu0 0.0
        %339 = vmatprep.subr.mxu0 0.0
        %340 = vmatpush1.xpose.msra.mxu0 0.0
        %341 = vmatprep.subr.mxu0 0.0
        %342 = vmatpush1.xpose.msra.mxu0 0.0
        %343 = vmatprep.subr.mxu0 0.0
        %344 = vmatpush1.xpose.msra.mxu0 0.0
        %345 = vmatprep.subr.mxu0 0.0
        %346 = vmatpush1.xpose.msra.mxu0 0.0
        %347 = vmatprep.subr.mxu0 0.0
        %348 = vmatpush1.xpose.msra.mxu0 0.0
        %349 = vmatprep.subr.mxu0 0.0
        %350 = vmatpush1.xpose.msra.mxu0 0.0
        %351 = vmatprep.subr.mxu0 0.0
        %352 = vmatpush1.xpose.msra.mxu0 0.0
        %353 = vmatprep.subr.mxu0 0.0
        %354 = vmatpush1.xpose.msra.mxu0 0.0
        %355 = vmatprep.subr.mxu0 0.0
        %356 = vmatpush1.xpose.msra.mxu0 0.0
        %357 = vmatprep.subr.mxu0 0.0
        %358 = vmatpush1.xpose.msra.mxu0 0.0
        %359 = vmatprep.subr.mxu0 0.0
        %360 = vmatpush1.xpose.msra.mxu0 0.0
        %361 = vmatprep.subr.mxu0 0.0
        %362 = vmatpush1.xpose.msra.mxu0 0.0
        %363 = vmatprep.subr.mxu0 0.0
        %364 = vmatpush1.xpose.msra.mxu0 0.0
        %365 = vmatprep.subr.mxu0 0.0
        %366 = vmatpush1.xpose.msra.mxu0 0.0
        %367 = vmatprep.subr.mxu0 0.0
        %368 = vmatpush1.xpose.msra.mxu0 0.0
        %369 = vmatprep.subr.mxu0 0.0
        %370 = vmatpush1.xpose.msra.mxu0 0.0
        %371 = vmatprep.subr.mxu0 0.0
        %372 = vmatpush1.xpose.msra.mxu0 0.0
        %373 = vmatprep.subr.mxu0 0.0
        %374 = vmatpush1.xpose.msra.mxu0 0.0
        %375 = vmatprep.subr.mxu0 0.0
        %376 = vmatpush1.xpose.msra.mxu0 0.0
        %377 = vmatprep.subr.mxu0 0.0
        %378 = vmatpush1.xpose.msra.mxu0 0.0
        %379 = vmatprep.subr.mxu0 0.0
        %380 = vmatpush1.xpose.msra.mxu0 0.0
        %381 = vmatprep.mubr.f32.mxu0 0.0
        %382 = vmatmul.mubr.f32.gmra.mrb[0].mxu0 %v309
        %v383 = vpop.f32.mrb[0].mxu0
        %v384 = vadd.f32 0.0, %v383
        %v385 = vpop.f32.mrb[0].mxu0
        %386 = vdwg.mxu0
        %v387 = vmul.f32 %v294, %v294
        %v388 = vsel %vm307, %v387, 0.0
        %389 = vadd.xlane.f32.xlu0 %v388
        %v390 = vpop.xlane.xlu0 %389
        %v391 = vmul.f32 %v384, 2.0
        %v393 = vlaneseq
        %v394 = vshrl.u32 %v393, 7
        %v395 = vsub.s32 0, %v394
        %v396 = vrot.slane %v298, %v395
        %v398 = vsub.f32 %v396, %v391
        %v399 = vmul.f32 %v306, %v398
        %vm400 = vcmask 80896
        %v401 = vsel %vm400, %v399, 0.0
        %402 = vadd.xlane.f32.xlu0 %v401
        %v403 = vpop.xlane.xlu0 %402
        %v404 = vadd.f32 %v390, %v403
        %v405 = vmax.f32 %v404, 0.0
        %v406 = vrsqrt.pop %v405
        %v407 = vmul.f32 %v405, %v406
        %vm408 = vcmp.eq.f32.partialorder %v405, inf
        %v409 = vsel %vm408, %v405, %v407
        %vm410 = vcmp.eq.f32.partialorder %v405, 0.0
        %v411 = vand.u32 %v405, 2147483648
        %v412 = vsel %vm410, %v411, %v409
        %v413 = vld [vmem:[%s268] sm:$0x1]
        %v414 = vmul.f32 %v306, %v412
        %v415 = vsel %vm400, %v414, 0.0
        %v416 = vrot.slane %v415, 4
        %v417 = vadd.f32 %v415, %v416
        %v418 = vrot.slane %v417, 2
        %v419 = vadd.f32 %v417, %v418
        %v420 = vrot.slane %v419, 1
        %v421 = vadd.f32 %v419, %v420
        %v422 = vadd.f32 %v413, %v421
        %vm423 = vcmask 73728
        %424 = vst.msk [vmem:[%s268] sm:$0x1] %vm423, %v422
        %v425 = vld [vmem:[%s274] sm:$0x1]
        %v426 = vsel %vm400, %v306, 0.0
        %v427 = vrot.slane %v426, 4
        %v428 = vadd.f32 %v426, %v427
        %v429 = vrot.slane %v428, 2
        %v430 = vadd.f32 %v428, %v429
        %v431 = vrot.slane %v430, 1
        %v432 = vadd.f32 %v430, %v431
        %v433 = vadd.f32 %v425, %v432
        %434 = vst.msk [vmem:[%s274] sm:$0x1] %vm423, %v433
        %s435 = sand.u32 %s142, 1
        %s436 = scalar_lea.sflag [#allocation4], %s435
        %s437 = sand.u32 %s142, 1
        %s438 = scalar_lea.vmem [#allocation5], %s437
        %s439 = sand.u32 %s168, 1
        %s440 = scalar_lea.sflag [#allocation7], %s439
        %s441 = sand.u32 %s168, 1
        %s442 = scalar_lea.vmem [#allocation6], %s441
        // Predicated region
        $region45: #{tpu_custom_call.1} parent=35 // pred_check
          %p443 = pneg %p152
        $region46: #{tpu_custom_call.1} parent=35 // pred_check_branch
          %445 = sbr.rel (%p443) target = $region48
        $region47: #{tpu_custom_call.1} parent=35 // pred_region
          %s447 = ssub.s32 16, 16
          %448 = vsyncadd %s436, %s447
          %s449 = smul.addr %s28, 16
          %s450 = scalar_lea.hbm %s4, %s449
          %s452 = sshll.u32 %s438, 4
          %s453 = int_to_ptr.vmem [resolvable:$true] %s452
          %455 = dma.vmem_to_hbm [thread:$0]  %s453, 16, %s450, %s436
        $region48: #{tpu_custom_call.1} parent=35 // pred_fallthru
          _
        // Predicated region
        $region49: #{tpu_custom_call.1} parent=35 // pred_check
          %p456 = pneg %p178
        $region50: #{tpu_custom_call.1} parent=35 // pred_check_branch
          %458 = sbr.rel (%p456) target = $region52
        $region51: #{tpu_custom_call.1} parent=35 // pred_region
          %s460 = ssub.s32 16, 16
          %461 = vsyncadd %s440, %s460
          %s462 = smul.addr %s28, 16
          %s463 = scalar_lea.hbm %s5, %s462
          %s465 = sshll.u32 %s442, 4
          %s466 = int_to_ptr.vmem [resolvable:$true] %s465
          %468 = dma.vmem_to_hbm [thread:$0]  %s466, 16, %s463, %s440
        $region52: #{tpu_custom_call.1} parent=35 // pred_fallthru
          _
      $region36: #{tpu_custom_call.1} parent=5 // pred_fallthru
        _
      %p469 = scmp.le.s32.totalorder 2, %s19
      // Predicated region
      $region53: #{tpu_custom_call.1} parent=5 // pred_check
        %p470 = pneg %p469
      $region54: #{tpu_custom_call.1} parent=5 // pred_check_branch
        %472 = sbr.rel (%p470) target = $region56
      $region55: #{tpu_custom_call.1} parent=5 // pred_region
        %s473 = ssub.s32 %s19, 2
        // Predicated region
        $region57: #{tpu_custom_call.1} parent=55 // pred_check
          %p474 = pneg %p158
        $region58: #{tpu_custom_call.1} parent=55 // pred_check_branch
          %476 = sbr.rel (%p474) target = $region60
        $region59: #{tpu_custom_call.1} parent=55 // pred_region
          %s477 = sand.u32 %s143, 1
          %s478 = scalar_lea.sflag [#allocation4], %s477
          %s479 = sand.u32 %s143, 1
          %s480 = scalar_lea.vmem [#allocation5], %s479
          %481 = dma.done %s478, 16
        $region60: #{tpu_custom_call.1} parent=55 // pred_fallthru
          _
        // Predicated region
        $region61: #{tpu_custom_call.1} parent=55 // pred_check
          %p482 = pneg %p184
        $region62: #{tpu_custom_call.1} parent=55 // pred_check_branch
          %484 = sbr.rel (%p482) target = $region64
        $region63: #{tpu_custom_call.1} parent=55 // pred_region
          %s485 = sand.u32 %s169, 1
          %s486 = scalar_lea.sflag [#allocation7], %s485
          %s487 = sand.u32 %s169, 1
          %s488 = scalar_lea.vmem [#allocation6], %s487
          %489 = dma.done %s486, 16
        $region64: #{tpu_custom_call.1} parent=55 // pred_fallthru
          _
      $region56: #{tpu_custom_call.1} parent=5 // pred_fallthru
        _
    $region6: #{tpu_custom_call.1} parent=1 // loop_footer
      %s23 = sadd.s32 1, %s19
    $region7: #{tpu_custom_call.1} parent=1 // loop_footer_branch
      %18 = sbr.rel target = $region3
    $region8: #{tpu_custom_call.1} parent=1 // loop_exit
      _
    %490 = vsyncpa [#allocation3], 1
    %s491 = scalar_lea.sflag [#allocation3], 1
    %492 = vsyncpa %s491, 1
    %493 = vsyncpa [#allocation4], 1
    %s494 = scalar_lea.sflag [#allocation4], 1
    %495 = vsyncpa %s494, 1
    %496 = vsyncpa [#allocation7], 1
    %s497 = scalar_lea.sflag [#allocation7], 1
    %498 = vsyncpa %s497, 1

</llo_original>
